<compile_context>
chip_gen: v6e
topology: v6e:2x2x1
jax: 0.10.0
libtpu: 0.0.40
codegen_flags: <defaults>
</compile_context>

<pallas_src>
import functools

import jax
import jax.numpy as jnp
from jax.experimental import pallas as pl
from jax.experimental.pallas import tpu as pltpu


def _proj_bias_kernel(x_ref, w_ref, b_ref, o_ref):
    # x_ref: (TM, CK) bf16   row-block of patchified pixels (rows = b,t,hp,wp)
    # w_ref: (CK, E)  bf16   flattened conv weight, (c, kh, kw) row order
    # b_ref: (1, E)   f32    conv bias
    # o_ref: (TM, E)  f32
    acc = jax.lax.dot_general(
        x_ref[...], w_ref[...],
        dimension_numbers=(((1,), (0,)), ((), ())),   # contract CK (lane axis)
        preferred_element_type=jnp.float32)           # f32 MXU accumulation
    o_ref[...] = (acc + b_ref[...]).astype(o_ref.dtype)


def patch_embed_forward(x, w_flat, b_row, *, patch, embed_dim, block_rows=512):
    """x: (B, C, T, H, W) f32; w_flat: (C*P*P, E) bf16; b_row: (1, E) f32.

    Returns (B, T, (H//P)*(W//P), embed_dim) f32 — same as the PyTorch module.
    """
    B, C, T, H, W = x.shape
    P = patch
    assert H % P == 0 and W % P == 0
    Hp, Wp = H // P, W // P
    K = Hp * Wp
    CK = C * P * P
    E = embed_dim
    M = B * T * K

    # Host-side patchify: one fused transpose+convert pass over x (bf16 out),
    # producing a plain row-major (M, CK) matrix whose row order (b,t,hp,wp)
    # and column order (c,kh,kw) match the output layout / weight flatten.
    x7 = x.reshape(B, C, T, Hp, P, Wp, P)
    xp = jnp.transpose(x7, (0, 2, 3, 5, 1, 4, 6))          # (B,T,Hp,Wp,C,P,P)
    xp = xp.reshape(M, CK).astype(jnp.bfloat16)

    # Row-block size: as large as possible (single block at small shapes);
    # 512 rows keeps double-buffered blocks well under v7x's 64 MiB VMEM at
    # realistic CK/E (e.g. 768/768) while filling the MXU.
    TM = M if M <= block_rows else block_rows
    grid = (pl.cdiv(M, TM),)

    cost = pl.CostEstimate(
        flops=2 * M * CK * E,
        transcendentals=0,
        bytes_accessed=M * CK * 2 + CK * E * 2 + E * 4 + M * E * 4)

    # VMEM: double-buffered x/out row blocks + resident weight/bias, 2x
    # headroom, capped at 48 MiB (v7x-safe; v5e/v6e have 128 MiB physical).
    x_blk = TM * CK * 2
    o_blk = TM * E * 4
    resident = CK * E * 2 + E * 4
    need = 2 * (x_blk + o_blk) + 2 * resident
    vmem_limit = int(min(48 * 1024 * 1024, max(16 * 1024 * 1024, 2 * need)))

    out = pl.pallas_call(
        _proj_bias_kernel,
        out_shape=jax.ShapeDtypeStruct((M, E), jnp.float32),
        grid_spec=pltpu.PrefetchScalarGridSpec(
            num_scalar_prefetch=0,
            grid=grid,
            in_specs=[
                # Contiguous row-block of patches; CK stays whole on lanes.
                pl.BlockSpec((TM, CK), lambda i: (i, 0)),
                # Projection weight / bias: resident, constant across the grid.
                pl.BlockSpec((CK, E), lambda i: (0, 0)),
                pl.BlockSpec((1, E), lambda i: (0, 0)),
            ],
            # Output written at exactly embed_dim lanes (no padding, no slice).
            out_specs=pl.BlockSpec((TM, E), lambda i: (i, 0)),
        ),
        compiler_params=pltpu.CompilerParams(
            dimension_semantics=("parallel",),
            vmem_limit_bytes=vmem_limit),
        cost_estimate=cost,
    )(xp, w_flat, b_row)

    return out.reshape(B, T, K, E)


class PatchEmbedPallas:
    """Image-to-patch embedding (TimeSformer PatchEmbed), Pallas TPU impl."""

    def __init__(self, img_size=16, patch_size=8, in_chans=4, embed_dim=32,
                 num_frames=2, key=None):
        self.img_size = (img_size, img_size)
        self.patch_size = (patch_size, patch_size)
        self.num_patches = (img_size // patch_size) ** 2 * num_frames
        self.in_chans = in_chans
        self.embed_dim = embed_dim
        if key is None:
            key = jax.random.PRNGKey(0)
        k_w, k_b = jax.random.split(key)
        fan_in = in_chans * patch_size * patch_size
        bound = 1.0 / (fan_in ** 0.5)
        # nn.Conv2d weight: (embed_dim, in_chans, P, P); bias: (embed_dim,)
        self.conv_weight = jax.random.uniform(
            k_w, (embed_dim, in_chans, patch_size, patch_size),
            minval=-bound, maxval=bound, dtype=jnp.float32)
        self.conv_bias = jax.random.uniform(
            k_b, (embed_dim,), minval=-bound, maxval=bound, dtype=jnp.float32)

        # Flatten the conv weight in its native (c, kh, kw) order -> (CK, E),
        # cast to bf16 for the MXU.  No lane padding of E: the kernel writes
        # exactly embed_dim lanes.
        ck = in_chans * patch_size * patch_size
        self.w_flat = (self.conv_weight.reshape(embed_dim, ck).T
                       .astype(jnp.bfloat16))                      # (CK, E)
        self.b_row = self.conv_bias.reshape(1, embed_dim)          # (1, E) f32

        self._forward = jax.jit(functools.partial(
            patch_embed_forward, patch=patch_size, embed_dim=embed_dim))

    def __call__(self, x):
        B, C, T, H, W = x.shape
        assert H == self.img_size[0] and W == self.img_size[1], (
            f"Input image size ({H}*{W}) doesn't match model "
            f"({self.img_size[0]}*{self.img_size[1]}).")
        return self._forward(x, self.w_flat, self.b_row)


def _reference(x, conv_weight, conv_bias, patch):
    """Pure-JAX conv reference.  Operands are rounded to bf16 (like the bf16
    MXU path) so the comparison is tight; accumulation stays f32."""
    B, C, T, H, W = x.shape
    xr = x.astype(jnp.bfloat16).astype(jnp.float32)
    wr = conv_weight.astype(jnp.bfloat16).astype(jnp.float32)
    xf = jnp.transpose(xr, (0, 2, 1, 3, 4)).reshape(B * T, C, H, W)
    y = jax.lax.conv_general_dilated(
        xf, wr, window_strides=(patch, patch), padding="VALID",
        dimension_numbers=("NCHW", "OIHW", "NCHW"),
        precision=jax.lax.Precision.HIGHEST)
    y = y + conv_bias.reshape(1, -1, 1, 1)
    BT, E, Hp, Wp = y.shape
    y = y.reshape(B, T, E, Hp * Wp)               # flatten(2)
    return jnp.transpose(y, (0, 1, 3, 2))         # '(b t) c k -> b t k c'


if __name__ == "__main__":
    key = jax.random.PRNGKey(0)
    k_x, k_p = jax.random.split(key)

    B, C, T, H, W = 2, 4, 2, 16, 16
    patch, embed_dim = 8, 32

    x = jax.random.normal(k_x, (B, C, T, H, W), dtype=jnp.float32)

    module = PatchEmbedPallas(img_size=H, patch_size=patch, in_chans=C,
                              embed_dim=embed_dim, num_frames=T, key=k_p)

    out = jax.block_until_ready(module(x))

    ref = _reference(x, module.conv_weight, module.conv_bias, patch)
    K = (H // patch) * (W // patch)
    assert out.shape == (B, T, K, embed_dim), out.shape
    max_err = float(jnp.max(jnp.abs(out - ref)))
    assert jnp.allclose(out, ref, atol=2e-3, rtol=2e-3), max_err

    print("KERNEL_OK")
</pallas_src>

<mosaic_0001>
module attributes {stable_mosaic.version = 11 : i64} {
  func.func @_proj_bias_kernel(%arg0: i32, %arg1: memref<16x256xbf16, #tpu.memory_space<vmem>>, %arg2: memref<256x32xbf16, #tpu.memory_space<vmem>>, %arg3: memref<1x32xf32, #tpu.memory_space<vmem>>, %arg4: memref<16x32xf32, #tpu.memory_space<vmem>>) attributes {dimension_semantics = [#tpu.dimension_semantics<parallel>], iteration_bounds = array<i64: 1>, scalar_prefetch = 0 : i64, scratch_operands = 0 : i64, tpu.core_type = #tpu.core_type<tc>, window_params = [{transform_indices = @transform_0, window_bounds = array<i64: 16, 256>}, {pipeline_mode = #tpu.pipeline_mode<synchronous>, transform_indices = @transform_1, window_bounds = array<i64: 256, 32>}, {pipeline_mode = #tpu.pipeline_mode<synchronous>, transform_indices = @transform_2, window_bounds = array<i64: 1, 32>}, {transform_indices = @transform_3, window_bounds = array<i64: 16, 32>}]} {
    %c0 = arith.constant 0 : index
    %c0_0 = arith.constant 0 : index
    %0 = vector.load %arg1[%c0, %c0_0] : memref<16x256xbf16, #tpu.memory_space<vmem>>, vector<16x256xbf16>
    %c0_1 = arith.constant 0 : index
    %c0_2 = arith.constant 0 : index
    %1 = vector.load %arg2[%c0_1, %c0_2] : memref<256x32xbf16, #tpu.memory_space<vmem>>, vector<256x32xbf16>
    %cst = arith.constant dense<0.000000e+00> : vector<16x32xf32>
    %2 = tpu.matmul %0, %1, %cst {dimension_numbers = #tpu.dot_dimension_numbers<[1], [0], [0], [1], [0, 0, 1, 1], [], []>} : vector<16x256xbf16>, vector<256x32xbf16>, vector<16x32xf32> -> vector<16x32xf32>
    %c0_3 = arith.constant 0 : index
    %c0_4 = arith.constant 0 : index
    %3 = vector.load %arg3[%c0_3, %c0_4] : memref<1x32xf32, #tpu.memory_space<vmem>>, vector<1x32xf32>
    %4 = vector.broadcast %3 : vector<1x32xf32> to vector<16x32xf32>
    %5 = arith.addf %2, %4 : vector<16x32xf32>
    %c0_5 = arith.constant 0 : index
    %c0_6 = arith.constant 0 : index
    %6 = vector.load %arg4[%c0_5, %c0_6] : memref<16x32xf32, #tpu.memory_space<vmem>>, vector<16x32xf32>
    tpu.vector_store %arg4[%c0_5, %c0_6], %5 {strides = array<i32>} : memref<16x32xf32, #tpu.memory_space<vmem>>, vector<16x32xf32>,
    return
  }
  func.func @transform_0(%arg0: i32) -> (i32, i32) {
    %c0_i32 = arith.constant 0 : i32
    %c0_i32_0 = arith.constant 0 : i32
    return %arg0, %c0_i32 : i32, i32
  }
  func.func @transform_1(%arg0: i32) -> (i32, i32) {
    %c0_i32 = arith.constant 0 : i32
    %c0_i32_0 = arith.constant 0 : i32
    %c0_i32_1 = arith.constant 0 : i32
    return %c0_i32, %c0_i32_0 : i32, i32
  }
  func.func @transform_2(%arg0: i32) -> (i32, i32) {
    %c0_i32 = arith.constant 0 : i32
    %c0_i32_0 = arith.constant 0 : i32
    %c0_i32_1 = arith.constant 0 : i32
    return %c0_i32, %c0_i32_0 : i32, i32
  }
  func.func @transform_3(%arg0: i32) -> (i32, i32) {
    %c0_i32 = arith.constant 0 : i32
    %c0_i32_0 = arith.constant 0 : i32
    return %arg0, %c0_i32 : i32, i32
  }
}

</mosaic_0001>

<llo_original>
// kernel: patch_embed_forward.1
$region0: #{patch_embed_forward.1}
  #allocation0 [shape = 'u32[]', space=smem, size = 0x4, offset = 0x4, fixed_abs, tag = 'smem constant byte address 0x4 - core index']
  #allocation1 [shape = 'u32[144,128]{1,0:T(1,128)}', space=vmem, size = 0x12000, scoped, tag = 'internal scratch']
  %s0 = inlined_call_operand.vmem [shape: bf16[16,256], index: 0, kind: input, shape index: {}]
  %s1 = inlined_call_operand.vmem [shape: bf16[256,32], index: 1, kind: input, shape index: {}]
  %s2 = inlined_call_operand.vmem [shape: f32[1,32], index: 2, kind: input, shape index: {}]
  %s3 = inlined_call_operand.hbm [shape: f32[16,32], index: 3, kind: output, shape index: {}]
  %s4 = sld [smem:[#allocation0]]
  $region22: #{patch_embed_forward.1} parent=0
    _
  %s6 = ssub.s32 1, %s4
  %s7 = scalar_select 0, %s6, %s4
  $region1: #{patch_embed_forward.1} parent=0
    #allocation2 [shape = 'u8[8192]{0}', space=vmem, size = 0x2000, scoped, tag = 'output window, operand 0, single buffered']
    #allocation3 [shape = 's32[1]{0}', space=sflag, size = 0x4, scoped, tag = 'scoped memory for patch_embed_forward.1']
    %8 = vsyncpa [#allocation3], 0
    // Predicated region
    $region2: #{patch_embed_forward.1} parent=1 // pred_check
      _
    $region3: #{patch_embed_forward.1} parent=1 // pred_check_branch
      %10 = sbr.rel (0) target = $region5
    $region4: #{patch_embed_forward.1} parent=1 // pred_region
      _
    $region5: #{patch_embed_forward.1} parent=1 // pred_fallthru
      _
    // Predicated region
    $region6: #{patch_embed_forward.1} parent=1 // pred_check
      _
    $region7: #{patch_embed_forward.1} parent=1 // pred_check_branch
      %12 = sbr.rel (0) target = $region9
    $region8: #{patch_embed_forward.1} parent=1 // pred_region
      _
    $region9: #{patch_embed_forward.1} parent=1 // pred_fallthru
      _
    // Predicated region
    $region10: #{patch_embed_forward.1} parent=1 // pred_check
      _
    $region11: #{patch_embed_forward.1} parent=1 // pred_check_branch
      %14 = sbr.rel (0) target = $region13
    $region12: #{patch_embed_forward.1} parent=1 // pred_region
      _
    $region13: #{patch_embed_forward.1} parent=1 // pred_fallthru
      _
    %v16 = vld [vmem:[%s0] sm:$0xff]
    %v17 = vld [vmem:[%s0 + $0x8] sm:$0xff]
    %v18 = vld [vmem:[%s1] sm:$0xf]
    %v19 = vld [vmem:[%s1 + $0x4] sm:$0xf]
    %v20 = vld [vmem:[%s1 + $0x8] sm:$0xf]
    %v21 = vld [vmem:[%s1 + $0xc] sm:$0xf]
    %v22 = vld [vmem:[%s1 + $0x10] sm:$0xf]
    %v23 = vld [vmem:[%s1 + $0x14] sm:$0xf]
    %v24 = vld [vmem:[%s1 + $0x18] sm:$0xf]
    %v25 = vld [vmem:[%s1 + $0x1c] sm:$0xf]
    %v26 = vld [vmem:[%s1 + $0x20] sm:$0xf]
    %v27 = vld [vmem:[%s1 + $0x24] sm:$0xf]
    %v28 = vld [vmem:[%s1 + $0x28] sm:$0xf]
    %v29 = vld [vmem:[%s1 + $0x2c] sm:$0xf]
    %v30 = vld [vmem:[%s1 + $0x30] sm:$0xf]
    %v31 = vld [vmem:[%s1 + $0x34] sm:$0xf]
    %v32 = vld [vmem:[%s1 + $0x38] sm:$0xf]
    %v33 = vld [vmem:[%s1 + $0x3c] sm:$0xf]
    %v34 = vld [vmem:[%s1 + $0x40] sm:$0xf]
    %v35 = vld [vmem:[%s1 + $0x44] sm:$0xf]
    %v36 = vld [vmem:[%s1 + $0x48] sm:$0xf]
    %v37 = vld [vmem:[%s1 + $0x4c] sm:$0xf]
    %v38 = vld [vmem:[%s1 + $0x50] sm:$0xf]
    %v39 = vld [vmem:[%s1 + $0x54] sm:$0xf]
    %v40 = vld [vmem:[%s1 + $0x58] sm:$0xf]
    %v41 = vld [vmem:[%s1 + $0x5c] sm:$0xf]
    %v42 = vld [vmem:[%s1 + $0x60] sm:$0xf]
    %v43 = vld [vmem:[%s1 + $0x64] sm:$0xf]
    %v44 = vld [vmem:[%s1 + $0x68] sm:$0xf]
    %v45 = vld [vmem:[%s1 + $0x6c] sm:$0xf]
    %v46 = vld [vmem:[%s1 + $0x70] sm:$0xf]
    %v47 = vld [vmem:[%s1 + $0x74] sm:$0xf]
    %v48 = vld [vmem:[%s1 + $0x78] sm:$0xf]
    %v49 = vld [vmem:[%s1 + $0x7c] sm:$0xf]
    %v50 = vld [vmem:[%s2] sm:$0x1]
    %v52 = vlaneseq
    %v53 = vshrl.u32 %v52, 7
    %v54 = vsub.s32 0, %v53
    %v55 = vrot.slane %v50, %v54
    %v59 = vunpack.c.l.b16 %v16
    %v60 = vunpack.c.h.b16 %v16
    %v61 = vunpack.c.l.b16 %v17
    %v62 = vunpack.c.h.b16 %v17
    %v63 = vpack.c.b16 %v61, %v59
    %v64 = vpack.c.b16 %v62, %v60
    %v99 = vunpack.c.l.b16 %v18
    %v100 = vunpack.c.l.b16 %v19
    %v101 = vunpack.c.l.b16 %v20
    %v102 = vunpack.c.l.b16 %v21
    %v103 = vunpack.c.l.b16 %v22
    %v104 = vunpack.c.l.b16 %v23
    %v105 = vunpack.c.l.b16 %v24
    %v106 = vunpack.c.l.b16 %v25
    %v107 = vunpack.c.l.b16 %v26
    %v108 = vunpack.c.l.b16 %v27
    %v109 = vunpack.c.l.b16 %v28
    %v110 = vunpack.c.l.b16 %v29
    %v111 = vunpack.c.l.b16 %v30
    %v112 = vunpack.c.l.b16 %v31
    %v113 = vunpack.c.l.b16 %v32
    %v114 = vunpack.c.l.b16 %v33
    %v115 = vunpack.c.l.b16 %v34
    %v116 = vunpack.c.l.b16 %v35
    %v117 = vunpack.c.l.b16 %v36
    %v118 = vunpack.c.l.b16 %v37
    %v119 = vunpack.c.l.b16 %v38
    %v120 = vunpack.c.l.b16 %v39
    %v121 = vunpack.c.l.b16 %v40
    %v122 = vunpack.c.l.b16 %v41
    %v123 = vunpack.c.l.b16 %v42
    %v124 = vunpack.c.l.b16 %v43
    %v125 = vunpack.c.l.b16 %v44
    %v126 = vunpack.c.l.b16 %v45
    %v127 = vunpack.c.l.b16 %v46
    %v128 = vunpack.c.l.b16 %v47
    %v129 = vunpack.c.l.b16 %v48
    %v130 = vunpack.c.l.b16 %v49
    %v131 = vpack.c.b16 %v100, %v99
    %v132 = vpack.c.b16 %v102, %v101
    %v133 = vpack.c.b16 %v104, %v103
    %v134 = vpack.c.b16 %v106, %v105
    %v135 = vpack.c.b16 %v108, %v107
    %v136 = vpack.c.b16 %v110, %v109
    %v137 = vpack.c.b16 %v112, %v111
    %v138 = vpack.c.b16 %v114, %v113
    %v139 = vpack.c.b16 %v116, %v115
    %v140 = vpack.c.b16 %v118, %v117
    %v141 = vpack.c.b16 %v120, %v119
    %v142 = vpack.c.b16 %v122, %v121
    %v143 = vpack.c.b16 %v124, %v123
    %v144 = vpack.c.b16 %v126, %v125
    %v145 = vpack.c.b16 %v128, %v127
    %v146 = vpack.c.b16 %v130, %v129
    %163 = vmatprep.subr.bf16.mxu0 0
    %164 = vmatpush1.bf16.msra.mxu0 %v138
    %165 = vmatprep.subr.bf16.mxu0 0
    %166 = vmatpush1.bf16.msra.mxu0 %v137
    %167 = vmatprep.subr.bf16.mxu0 0
    %168 = vmatpush1.bf16.msra.mxu0 %v136
    %169 = vmatprep.subr.bf16.mxu0 0
    %170 = vmatpush1.bf16.msra.mxu0 %v135
    %171 = vmatprep.subr.bf16.mxu0 0
    %172 = vmatpush1.bf16.msra.mxu0 %v134
    %173 = vmatprep.subr.bf16.mxu0 0
    %174 = vmatpush1.bf16.msra.mxu0 %v133
    %175 = vmatprep.subr.bf16.mxu0 0
    %176 = vmatpush1.bf16.msra.mxu0 %v132
    %177 = vmatprep.subr.bf16.mxu0 0
    %178 = vmatpush1.bf16.msra.mxu0 %v131
    %179 = vmatprep.subr.bf16.mxu0 0
    %180 = vmatpush2.bf16.msra.mxu0 %v146
    %181 = vmatprep.subr.bf16.mxu0 0
    %182 = vmatpush2.bf16.msra.mxu0 %v145
    %183 = vmatprep.subr.bf16.mxu0 0
    %184 = vmatpush2.bf16.msra.mxu0 %v144
    %185 = vmatprep.subr.bf16.mxu0 0
    %186 = vmatpush2.bf16.msra.mxu0 %v143
    %187 = vmatprep.subr.bf16.mxu0 0
    %188 = vmatpush2.bf16.msra.mxu0 %v142
    %189 = vmatprep.subr.bf16.mxu0 0
    %190 = vmatpush2.bf16.msra.mxu0 %v141
    %191 = vmatprep.subr.bf16.mxu0 0
    %192 = vmatpush2.bf16.msra.mxu0 %v140
    %193 = vmatprep.subr.bf16.mxu0 0
    %194 = vmatpush2.bf16.msra.mxu0 %v139
    %195 = vmatprep.mubr.bf16.mxu0 %v64
    %196 = vmatmul.mubr.bf16.gmra.mxu0 %v63
    %v197 = vpop.f32.mrf.mxu0
    %v198 = vadd.f32 %v55, %v197
    %v199 = vpop.f32.mrf.mxu0
    %v200 = vpop.f32.mrf.mxu0
    %v201 = vadd.f32 %v55, %v200
    %v202 = vpop.f32.mrf.mxu0
    %203 = vdwg.mxu0
    %vm204 = vcmask 261120
    %205 = vst.msk [vmem:[#allocation2] sm:$0xff] %vm204, %v198
    %206 = vst.msk [vmem:[#allocation2 + $0x8] sm:$0xff] %vm204, %v201
    // Predicated region
    $region14: #{patch_embed_forward.1} parent=1 // pred_check
      _
    $region15: #{patch_embed_forward.1} parent=1 // pred_check_branch
      %208 = sbr.rel (0) target = $region17
    $region16: #{patch_embed_forward.1} parent=1 // pred_region
      %s210 = ssub.s32 256, 256
      %211 = vsyncadd [#allocation3], %s210
      %s212 = sshll.u32 [#allocation2], 4
      %s213 = int_to_ptr.vmem [resolvable:$true] %s212
      %218 = dma.vmem_to_hbm [thread:$0]  %s213, 256, %s3, [#allocation3], 128, 128, 8
    $region17: #{patch_embed_forward.1} parent=1 // pred_fallthru
      _
    // Predicated region
    $region18: #{patch_embed_forward.1} parent=1 // pred_check
      _
    $region19: #{patch_embed_forward.1} parent=1 // pred_check_branch
      %220 = sbr.rel (0) target = $region21
    $region20: #{patch_embed_forward.1} parent=1 // pred_region
      %221 = dma.done [#allocation3], 256
    $region21: #{patch_embed_forward.1} parent=1 // pred_fallthru
      _
    %222 = vsyncpa [#allocation3], 1

</llo_original>
